<compile_context>
chip_gen: v6e
topology: v6e:2x2x1
jax: 0.10.0
libtpu: 0.0.40
codegen_flags: <defaults>
</compile_context>

<pallas_src>
import functools

import jax
import jax.numpy as jnp
import numpy as np
from jax import lax
from jax.experimental import pallas as pl
from jax.experimental.pallas import tpu as pltpu

_LANE = 128


def _round_up(x, m):
    return ((x + m - 1) // m) * m


def _patch_embed_kernel(x_ref, w_ref, b_ref, o_ref):
    # (tm, Kp) bf16 @ (Kp, Ep) bf16 -> f32 on the MXU, add bias, cast to out dtype.
    acc = jnp.dot(x_ref[...], w_ref[...], preferred_element_type=jnp.float32)
    o_ref[...] = (acc + b_ref[...]).astype(o_ref.dtype)


def _vmem_bytes_estimate(tm, k_pad, e_pad, in_bytes, out_bytes):
    # Double-buffered input tile + (constant, but still double-buffered) weight
    # + bias + double-buffered output tile.
    return (2 * tm * k_pad * in_bytes
            + 2 * k_pad * e_pad * in_bytes
            + 2 * e_pad * 4
            + 2 * tm * e_pad * out_bytes)


def _pick_tm(M, k_pad, e_pad, *, target_tm=512, budget_bytes=44 * 1024 * 1024,
             in_bytes=2, out_bytes=4):
    # Big lane/sublane-dense tile, but don't over-pad tiny problems and don't
    # blow the (v7x-binding) VMEM budget.
    tm = min(max(target_tm, 256), _round_up(max(M, 1), 256))
    while tm > 128 and _vmem_bytes_estimate(tm, k_pad, e_pad, in_bytes,
                                            out_bytes) > budget_bytes:
        tm //= 2
    # TODO(synk): for very large embed_dim*K (weight block alone > budget) add a
    # second grid axis over E instead of relying on a bigger vmem limit.
    return tm


def prepare_patch_embed_params(weight, bias, *, patch_size, in_chans,
                               compute_dtype=jnp.bfloat16):
    """One-time Conv3d parameter prep (keep OUTSIDE the per-call jit path).

    weight: (E, C, pd, ph, pw), bias: (E,)
    Returns:
      w_kE: (K_pad, E_pad) in compute_dtype, K flattened in (pd, ph, pw, C) order
      b_1E: (1, E_pad) float32
    """
    E = weight.shape[0]
    pd, ph, pw = patch_size
    K = in_chans * pd * ph * pw
    K_pad = _round_up(K, _LANE)
    E_pad = _round_up(E, _LANE)
    # (E, C, pd, ph, pw) -> (E, pd, ph, pw, C) -> (E, K) -> (K, E): the channel
    # permutation lives on this tiny tensor, not on the big activation.
    w = jnp.transpose(weight, (0, 2, 3, 4, 1)).reshape(E, K)
    w = jnp.transpose(w, (1, 0))
    w = jnp.pad(w, ((0, K_pad - K), (0, E_pad - E))).astype(compute_dtype)
    b = jnp.pad(bias.astype(jnp.float32), (0, E_pad - E)).reshape(1, E_pad)
    return w, b


def patch_embed_3d(x, w_kE, b_1E, *, img_size, patch_size, in_chans, embed_dim,
                   tm=None, compute_dtype=jnp.bfloat16, out_dtype=None):
    """Forward pass of PatchEmbed3D.

    x      : (B, L, S) with S = prod(img_size) * in_chans  (in_chan_last=True)
    w_kE   : (K_pad, E_pad) prepared by prepare_patch_embed_params
    b_1E   : (1, E_pad)     prepared by prepare_patch_embed_params
    returns: (B*L, num_patches, embed_dim)
    """
    B, L, S = x.shape
    D, H, W = img_size
    pd, ph, pw = patch_size
    assert S == D * H * W * in_chans, "Input image total size doesn't match config"
    Gd, Gh, Gw = D // pd, H // ph, W // pw
    N = B * L
    P = Gd * Gh * Gw
    E = embed_dim
    K = in_chans * pd * ph * pw
    K_pad, E_pad = w_kE.shape
    out_dtype = out_dtype or x.dtype
    out_bytes = jnp.dtype(out_dtype).itemsize
    M = N * P

    # Patchify with bf16 cast fused in. Flattened K order is (pd, ph, pw, C),
    # so the innermost (pw, C) elements stay contiguous through the transpose.
    xr = x.astype(compute_dtype).reshape(N, Gd, pd, Gh, ph, Gw, pw, in_chans)
    xr = xr.transpose(0, 1, 3, 5, 2, 4, 6, 7)          # (N, Gd, Gh, Gw, pd, ph, pw, C)
    patches = xr.reshape(M, K)

    if tm is None:
        tm = _pick_tm(M, K_pad, E_pad, out_bytes=out_bytes)
    M_pad = _round_up(M, tm)

    pad_m, pad_k = M_pad - M, K_pad - K
    if pad_m or pad_k:
        patches = jnp.pad(patches, ((0, pad_m), (0, pad_k)))

    vmem_est = _vmem_bytes_estimate(tm, K_pad, E_pad, 2, out_bytes)
    vmem_limit = int(min(64 * 1024 * 1024, max(32 * 1024 * 1024, 2 * vmem_est)))

    out = pl.pallas_call(
        _patch_embed_kernel,
        out_shape=jax.ShapeDtypeStruct((M_pad, E_pad), out_dtype),
        grid_spec=pltpu.PrefetchScalarGridSpec(
            num_scalar_prefetch=0,
            grid=(M_pad // tm,),
            in_specs=[
                pl.BlockSpec((tm, K_pad), lambda i: (i, 0)),
                pl.BlockSpec((K_pad, E_pad), lambda i: (0, 0)),
                pl.BlockSpec((1, E_pad), lambda i: (0, 0)),
            ],
            out_specs=pl.BlockSpec((tm, E_pad), lambda i: (i, 0)),
        ),
        compiler_params=pltpu.CompilerParams(
            dimension_semantics=("parallel",),
            vmem_limit_bytes=vmem_limit,
        ),
    )(patches, w_kE, b_1E)

    return out[:M, :E].reshape(N, P, E)


def _reference_conv3d(x, weight, bias, *, img_size, patch_size, in_chans):
    """Pure-JAX f32 reference using lax.conv (mirrors the PyTorch forward)."""
    B, L, S = x.shape
    D, H, W = img_size
    N = B * L
    xr = x.reshape(N, D, H, W, in_chans).transpose(0, 4, 1, 2, 3)  # NCDHW
    y = lax.conv_general_dilated(
        xr, weight,
        window_strides=patch_size,
        padding="VALID",
        dimension_numbers=("NCDHW", "OIDHW", "NCDHW"),
    )
    y = y + bias.reshape(1, -1, 1, 1, 1)
    Nn, E = y.shape[0], y.shape[1]
    return y.reshape(Nn, E, -1).transpose(0, 2, 1)  # (N, P, E)


if __name__ == "__main__":
    # Small config: img_size=(8,8,8), patch_size=(4,4,4), in_chans=2, embed_dim=32
    img_size = (8, 8, 8)
    patch_size = (4, 4, 4)
    in_chans = 2
    embed_dim = 32
    B, L = 2, 2
    S = int(np.prod(img_size)) * in_chans  # 1024

    key = jax.random.PRNGKey(0)
    kx, kw, kb = jax.random.split(key, 3)

    x = jax.random.normal(kx, (B, L, S), dtype=jnp.float32)
    fan_in = in_chans * int(np.prod(patch_size))
    bound = 1.0 / np.sqrt(fan_in)
    weight = jax.random.uniform(
        kw, (embed_dim, in_chans, *patch_size), jnp.float32, -bound, bound)
    bias = jax.random.uniform(kb, (embed_dim,), jnp.float32, -bound, bound)

    # One-time weight flatten/pad/cast, outside the per-call jit path.
    w_kE, b_1E = prepare_patch_embed_params(
        weight, bias, patch_size=patch_size, in_chans=in_chans)

    fwd = jax.jit(functools.partial(
        patch_embed_3d, img_size=img_size, patch_size=patch_size,
        in_chans=in_chans, embed_dim=embed_dim))
    out = jax.block_until_ready(fwd(x, w_kE, b_1E))

    ref = _reference_conv3d(x, weight, bias, img_size=img_size,
                            patch_size=patch_size, in_chans=in_chans)
    assert out.shape == ref.shape == (B * L, 8, embed_dim), out.shape
    # bf16 matmul inputs with f32 accumulation -> compare with bf16-level tolerance.
    assert jnp.allclose(out, ref, atol=2e-2, rtol=2e-2), "mismatch vs conv reference"

    print("KERNEL_OK")
</pallas_src>

<mosaic_0001>
module attributes {stable_mosaic.version = 11 : i64} {
  func.func @_patch_embed_kernel(%arg0: i32, %arg1: memref<256x128xbf16, #tpu.memory_space<vmem>>, %arg2: memref<128x128xbf16, #tpu.memory_space<vmem>>, %arg3: memref<1x128xf32, #tpu.memory_space<vmem>>, %arg4: memref<256x128xf32, #tpu.memory_space<vmem>>) attributes {dimension_semantics = [#tpu.dimension_semantics<parallel>], iteration_bounds = array<i64: 1>, scalar_prefetch = 0 : i64, scratch_operands = 0 : i64, tpu.core_type = #tpu.core_type<tc>, window_params = [{transform_indices = @transform_0, window_bounds = array<i64: 256, 128>}, {pipeline_mode = #tpu.pipeline_mode<synchronous>, transform_indices = @transform_1, window_bounds = array<i64: 128, 128>}, {pipeline_mode = #tpu.pipeline_mode<synchronous>, transform_indices = @transform_2, window_bounds = array<i64: 1, 128>}, {transform_indices = @transform_3, window_bounds = array<i64: 256, 128>}]} {
    %c0 = arith.constant 0 : index
    %c0_0 = arith.constant 0 : index
    %0 = vector.load %arg1[%c0, %c0_0] : memref<256x128xbf16, #tpu.memory_space<vmem>>, vector<256x128xbf16>
    %c0_1 = arith.constant 0 : index
    %c0_2 = arith.constant 0 : index
    %1 = vector.load %arg2[%c0_1, %c0_2] : memref<128x128xbf16, #tpu.memory_space<vmem>>, vector<128x128xbf16>
    %cst = arith.constant dense<0.000000e+00> : vector<256x128xf32>
    %2 = tpu.matmul %0, %1, %cst {dimension_numbers = #tpu.dot_dimension_numbers<[1], [0], [0], [1], [0, 0, 1, 1], [], []>} : vector<256x128xbf16>, vector<128x128xbf16>, vector<256x128xf32> -> vector<256x128xf32>
    %c0_3 = arith.constant 0 : index
    %c0_4 = arith.constant 0 : index
    %3 = vector.load %arg3[%c0_3, %c0_4] : memref<1x128xf32, #tpu.memory_space<vmem>>, vector<1x128xf32>
    %4 = vector.broadcast %3 : vector<1x128xf32> to vector<256x128xf32>
    %5 = arith.addf %2, %4 : vector<256x128xf32>
    %c0_5 = arith.constant 0 : index
    %c0_6 = arith.constant 0 : index
    %6 = vector.load %arg4[%c0_5, %c0_6] : memref<256x128xf32, #tpu.memory_space<vmem>>, vector<256x128xf32>
    tpu.vector_store %arg4[%c0_5, %c0_6], %5 {strides = array<i32>} : memref<256x128xf32, #tpu.memory_space<vmem>>, vector<256x128xf32>,
    return
  }
  func.func @transform_0(%arg0: i32) -> (i32, i32) {
    %c0_i32 = arith.constant 0 : i32
    %c0_i32_0 = arith.constant 0 : i32
    return %arg0, %c0_i32 : i32, i32
  }
  func.func @transform_1(%arg0: i32) -> (i32, i32) {
    %c0_i32 = arith.constant 0 : i32
    %c0_i32_0 = arith.constant 0 : i32
    %c0_i32_1 = arith.constant 0 : i32
    return %c0_i32, %c0_i32_0 : i32, i32
  }
  func.func @transform_2(%arg0: i32) -> (i32, i32) {
    %c0_i32 = arith.constant 0 : i32
    %c0_i32_0 = arith.constant 0 : i32
    %c0_i32_1 = arith.constant 0 : i32
    return %c0_i32, %c0_i32_0 : i32, i32
  }
  func.func @transform_3(%arg0: i32) -> (i32, i32) {
    %c0_i32 = arith.constant 0 : i32
    %c0_i32_0 = arith.constant 0 : i32
    return %arg0, %c0_i32 : i32, i32
  }
}

</mosaic_0001>

<llo_original>
// kernel: patch_embed_3d.1
$region0: #{patch_embed_3d.1}
  #allocation0 [shape = 'u32[]', space=smem, size = 0x4, offset = 0x4, fixed_abs, tag = 'smem constant byte address 0x4 - core index']
  #allocation1 [shape = 'u32[144,128]{1,0:T(1,128)}', space=vmem, size = 0x12000, scoped, tag = 'internal scratch']
  %s0 = inlined_call_operand.vmem [shape: bf16[256,128], index: 0, kind: input, shape index: {}]
  %s1 = inlined_call_operand.vmem [shape: bf16[128,128], index: 1, kind: input, shape index: {}]
  %s2 = inlined_call_operand.vmem [shape: f32[1,128], index: 2, kind: input, shape index: {}]
  %s3 = inlined_call_operand.vmem [shape: f32[256,128], index: 3, kind: output, shape index: {}]
  %s4 = sld [smem:[#allocation0]]
  $region22: #{patch_embed_3d.1} parent=0
    _
  %s6 = ssub.s32 1, %s4
  %s7 = scalar_select 0, %s6, %s4
  // Predicated region
  $region2: #{patch_embed_3d.1} parent=0 // pred_check
    _
  $region3: #{patch_embed_3d.1} parent=0 // pred_check_branch
    %9 = sbr.rel (0) target = $region5
  $region4: #{patch_embed_3d.1} parent=0 // pred_region
    _
  $region5: #{patch_embed_3d.1} parent=0 // pred_fallthru
    _
  // Predicated region
  $region6: #{patch_embed_3d.1} parent=0 // pred_check
    _
  $region7: #{patch_embed_3d.1} parent=0 // pred_check_branch
    %11 = sbr.rel (0) target = $region9
  $region8: #{patch_embed_3d.1} parent=0 // pred_region
    _
  $region9: #{patch_embed_3d.1} parent=0 // pred_fallthru
    _
  // Predicated region
  $region10: #{patch_embed_3d.1} parent=0 // pred_check
    _
  $region11: #{patch_embed_3d.1} parent=0 // pred_check_branch
    %13 = sbr.rel (0) target = $region13
  $region12: #{patch_embed_3d.1} parent=0 // pred_region
    _
  $region13: #{patch_embed_3d.1} parent=0 // pred_fallthru
    _
  %v15 = vld [vmem:[%s0] sm:$0xf]
  %v16 = vld [vmem:[%s0 + $0x4] sm:$0xf]
  %v17 = vld [vmem:[%s0 + $0x8] sm:$0xf]
  %v18 = vld [vmem:[%s0 + $0xc] sm:$0xf]
  %v19 = vld [vmem:[%s0 + $0x10] sm:$0xf]
  %v20 = vld [vmem:[%s0 + $0x14] sm:$0xf]
  %v21 = vld [vmem:[%s0 + $0x18] sm:$0xf]
  %v22 = vld [vmem:[%s0 + $0x1c] sm:$0xf]
  %v23 = vld [vmem:[%s0 + $0x20] sm:$0xf]
  %v24 = vld [vmem:[%s0 + $0x24] sm:$0xf]
  %v25 = vld [vmem:[%s0 + $0x28] sm:$0xf]
  %v26 = vld [vmem:[%s0 + $0x2c] sm:$0xf]
  %v27 = vld [vmem:[%s0 + $0x30] sm:$0xf]
  %v28 = vld [vmem:[%s0 + $0x34] sm:$0xf]
  %v29 = vld [vmem:[%s0 + $0x38] sm:$0xf]
  %v30 = vld [vmem:[%s0 + $0x3c] sm:$0xf]
  %v31 = vld [vmem:[%s0 + $0x40] sm:$0xf]
  %v32 = vld [vmem:[%s0 + $0x44] sm:$0xf]
  %v33 = vld [vmem:[%s0 + $0x48] sm:$0xf]
  %v34 = vld [vmem:[%s0 + $0x4c] sm:$0xf]
  %v35 = vld [vmem:[%s0 + $0x50] sm:$0xf]
  %v36 = vld [vmem:[%s0 + $0x54] sm:$0xf]
  %v37 = vld [vmem:[%s0 + $0x58] sm:$0xf]
  %v38 = vld [vmem:[%s0 + $0x5c] sm:$0xf]
  %v39 = vld [vmem:[%s0 + $0x60] sm:$0xf]
  %v40 = vld [vmem:[%s0 + $0x64] sm:$0xf]
  %v41 = vld [vmem:[%s0 + $0x68] sm:$0xf]
  %v42 = vld [vmem:[%s0 + $0x6c] sm:$0xf]
  %v43 = vld [vmem:[%s0 + $0x70] sm:$0xf]
  %v44 = vld [vmem:[%s0 + $0x74] sm:$0xf]
  %v45 = vld [vmem:[%s0 + $0x78] sm:$0xf]
  %v46 = vld [vmem:[%s0 + $0x7c] sm:$0xf]
  %v47 = vld [vmem:[%s1] sm:$0xf]
  %v48 = vld [vmem:[%s1 + $0x4] sm:$0xf]
  %v49 = vld [vmem:[%s1 + $0x8] sm:$0xf]
  %v50 = vld [vmem:[%s1 + $0xc] sm:$0xf]
  %v51 = vld [vmem:[%s1 + $0x10] sm:$0xf]
  %v52 = vld [vmem:[%s1 + $0x14] sm:$0xf]
  %v53 = vld [vmem:[%s1 + $0x18] sm:$0xf]
  %v54 = vld [vmem:[%s1 + $0x1c] sm:$0xf]
  %v55 = vld [vmem:[%s1 + $0x20] sm:$0xf]
  %v56 = vld [vmem:[%s1 + $0x24] sm:$0xf]
  %v57 = vld [vmem:[%s1 + $0x28] sm:$0xf]
  %v58 = vld [vmem:[%s1 + $0x2c] sm:$0xf]
  %v59 = vld [vmem:[%s1 + $0x30] sm:$0xf]
  %v60 = vld [vmem:[%s1 + $0x34] sm:$0xf]
  %v61 = vld [vmem:[%s1 + $0x38] sm:$0xf]
  %v62 = vld [vmem:[%s1 + $0x3c] sm:$0xf]
  %v63 = vld [vmem:[%s2] sm:$0x1]
  %v65 = vlaneseq
  %v66 = vshrl.u32 %v65, 7
  %v67 = vsub.s32 0, %v66
  %v68 = vrot.slane %v63, %v67
  %v102 = vunpack.c.l.b16 %v15
  %v103 = vunpack.c.l.b16 %v16
  %v104 = vunpack.c.l.b16 %v17
  %v105 = vunpack.c.l.b16 %v18
  %v106 = vunpack.c.l.b16 %v19
  %v107 = vunpack.c.l.b16 %v20
  %v108 = vunpack.c.l.b16 %v21
  %v109 = vunpack.c.l.b16 %v22
  %v110 = vunpack.c.l.b16 %v23
  %v111 = vunpack.c.l.b16 %v24
  %v112 = vunpack.c.l.b16 %v25
  %v113 = vunpack.c.l.b16 %v26
  %v114 = vunpack.c.l.b16 %v27
  %v115 = vunpack.c.l.b16 %v28
  %v116 = vunpack.c.l.b16 %v29
  %v117 = vunpack.c.l.b16 %v30
  %v118 = vunpack.c.l.b16 %v31
  %v119 = vunpack.c.l.b16 %v32
  %v120 = vunpack.c.l.b16 %v33
  %v121 = vunpack.c.l.b16 %v34
  %v122 = vunpack.c.l.b16 %v35
  %v123 = vunpack.c.l.b16 %v36
  %v124 = vunpack.c.l.b16 %v37
  %v125 = vunpack.c.l.b16 %v38
  %v126 = vunpack.c.l.b16 %v39
  %v127 = vunpack.c.l.b16 %v40
  %v128 = vunpack.c.l.b16 %v41
  %v129 = vunpack.c.l.b16 %v42
  %v130 = vunpack.c.l.b16 %v43
  %v131 = vunpack.c.l.b16 %v44
  %v132 = vunpack.c.l.b16 %v45
  %v133 = vunpack.c.l.b16 %v46
  %v134 = vpack.c.b16 %v103, %v102
  %v135 = vpack.c.b16 %v105, %v104
  %v136 = vpack.c.b16 %v107, %v106
  %v137 = vpack.c.b16 %v109, %v108
  %v138 = vpack.c.b16 %v111, %v110
  %v139 = vpack.c.b16 %v113, %v112
  %v140 = vpack.c.b16 %v115, %v114
  %v141 = vpack.c.b16 %v117, %v116
  %v142 = vpack.c.b16 %v119, %v118
  %v143 = vpack.c.b16 %v121, %v120
  %v144 = vpack.c.b16 %v123, %v122
  %v145 = vpack.c.b16 %v125, %v124
  %v146 = vpack.c.b16 %v127, %v126
  %v147 = vpack.c.b16 %v129, %v128
  %v148 = vpack.c.b16 %v131, %v130
  %v149 = vpack.c.b16 %v133, %v132
  %v182 = vunpack.c.l.b16 %v47
  %v183 = vunpack.c.l.b16 %v48
  %v184 = vunpack.c.l.b16 %v49
  %v185 = vunpack.c.l.b16 %v50
  %v186 = vunpack.c.l.b16 %v51
  %v187 = vunpack.c.l.b16 %v52
  %v188 = vunpack.c.l.b16 %v53
  %v189 = vunpack.c.l.b16 %v54
  %v190 = vunpack.c.l.b16 %v55
  %v191 = vunpack.c.l.b16 %v56
  %v192 = vunpack.c.l.b16 %v57
  %v193 = vunpack.c.l.b16 %v58
  %v194 = vunpack.c.l.b16 %v59
  %v195 = vunpack.c.l.b16 %v60
  %v196 = vunpack.c.l.b16 %v61
  %v197 = vunpack.c.l.b16 %v62
  %v198 = vpack.c.b16 %v183, %v182
  %v199 = vpack.c.b16 %v185, %v184
  %v200 = vpack.c.b16 %v187, %v186
  %v201 = vpack.c.b16 %v189, %v188
  %v202 = vpack.c.b16 %v191, %v190
  %v203 = vpack.c.b16 %v193, %v192
  %v204 = vpack.c.b16 %v195, %v194
  %v205 = vpack.c.b16 %v197, %v196
  %214 = vmatprep.subr.bf16.mxu0 0
  %215 = vmatpush1.bf16.msra.mxu0 %v205
  %216 = vmatprep.subr.bf16.mxu0 0
  %217 = vmatpush1.bf16.msra.mxu0 %v204
  %218 = vmatprep.subr.bf16.mxu0 0
  %219 = vmatpush1.bf16.msra.mxu0 %v203
  %220 = vmatprep.subr.bf16.mxu0 0
  %221 = vmatpush1.bf16.msra.mxu0 %v202
  %222 = vmatprep.subr.bf16.mxu0 0
  %223 = vmatpush1.bf16.msra.mxu0 %v201
  %224 = vmatprep.subr.bf16.mxu0 0
  %225 = vmatpush1.bf16.msra.mxu0 %v200
  %226 = vmatprep.subr.bf16.mxu0 0
  %227 = vmatpush1.bf16.msra.mxu0 %v199
  %228 = vmatprep.subr.bf16.mxu0 0
  %229 = vmatpush1.bf16.msra.mxu0 %v198
  %230 = vmatprep.subr.bf16.mxu0 0
  %231 = vmatpush2.bf16.msra.mxu0 0
  %232 = vmatprep.subr.bf16.mxu0 0
  %233 = vmatpush2.bf16.msra.mxu0 0
  %234 = vmatprep.subr.bf16.mxu0 0
  %235 = vmatpush2.bf16.msra.mxu0 0
  %236 = vmatprep.subr.bf16.mxu0 0
  %237 = vmatpush2.bf16.msra.mxu0 0
  %238 = vmatprep.subr.bf16.mxu0 0
  %239 = vmatpush2.bf16.msra.mxu0 0
  %240 = vmatprep.subr.bf16.mxu0 0
  %241 = vmatpush2.bf16.msra.mxu0 0
  %242 = vmatprep.subr.bf16.mxu0 0
  %243 = vmatpush2.bf16.msra.mxu0 0
  %244 = vmatprep.subr.bf16.mxu0 0
  %245 = vmatpush2.bf16.msra.mxu0 0
  %246 = vmatprep.mubr.bf16.mxu0 0
  %247 = vmatmul.mubr.bf16.gmra.mxu0 %v134
  %v248 = vpop.f32.mrf.mxu0
  %v249 = vadd.f32 %v68, %v248
  %v250 = vpop.f32.mrf.mxu0
  %v251 = vpop.f32.mrf.mxu0
  %v252 = vadd.f32 %v68, %v251
  %v253 = vpop.f32.mrf.mxu0
  %254 = vmatprep.mubr.bf16.mxu0 0
  %255 = vmatmul.mubr.bf16.gmra.mxu0 %v135
  %v256 = vpop.f32.mrf.mxu0
  %v257 = vadd.f32 %v68, %v256
  %v258 = vpop.f32.mrf.mxu0
  %v259 = vpop.f32.mrf.mxu0
  %v260 = vadd.f32 %v68, %v259
  %v261 = vpop.f32.mrf.mxu0
  %262 = vmatprep.mubr.bf16.mxu0 0
  %263 = vmatmul.mubr.bf16.gmra.mxu0 %v136
  %v264 = vpop.f32.mrf.mxu0
  %v265 = vadd.f32 %v68, %v264
  %v266 = vpop.f32.mrf.mxu0
  %v267 = vpop.f32.mrf.mxu0
  %v268 = vadd.f32 %v68, %v267
  %v269 = vpop.f32.mrf.mxu0
  %270 = vmatprep.mubr.bf16.mxu0 0
  %271 = vmatmul.mubr.bf16.gmra.mxu0 %v137
  %v272 = vpop.f32.mrf.mxu0
  %v273 = vadd.f32 %v68, %v272
  %v274 = vpop.f32.mrf.mxu0
  %v275 = vpop.f32.mrf.mxu0
  %v276 = vadd.f32 %v68, %v275
  %v277 = vpop.f32.mrf.mxu0
  %278 = vmatprep.mubr.bf16.mxu0 0
  %279 = vmatmul.mubr.bf16.gmra.mxu0 %v138
  %v280 = vpop.f32.mrf.mxu0
  %v281 = vadd.f32 %v68, %v280
  %v282 = vpop.f32.mrf.mxu0
  %v283 = vpop.f32.mrf.mxu0
  %v284 = vadd.f32 %v68, %v283
  %v285 = vpop.f32.mrf.mxu0
  %286 = vmatprep.mubr.bf16.mxu0 0
  %287 = vmatmul.mubr.bf16.gmra.mxu0 %v139
  %v288 = vpop.f32.mrf.mxu0
  %v289 = vadd.f32 %v68, %v288
  %v290 = vpop.f32.mrf.mxu0
  %v291 = vpop.f32.mrf.mxu0
  %v292 = vadd.f32 %v68, %v291
  %v293 = vpop.f32.mrf.mxu0
  %294 = vmatprep.mubr.bf16.mxu0 0
  %295 = vmatmul.mubr.bf16.gmra.mxu0 %v140
  %v296 = vpop.f32.mrf.mxu0
  %v297 = vadd.f32 %v68, %v296
  %v298 = vpop.f32.mrf.mxu0
  %v299 = vpop.f32.mrf.mxu0
  %v300 = vadd.f32 %v68, %v299
  %v301 = vpop.f32.mrf.mxu0
  %302 = vmatprep.mubr.bf16.mxu0 0
  %303 = vmatmul.mubr.bf16.gmra.mxu0 %v141
  %v304 = vpop.f32.mrf.mxu0
  %v305 = vadd.f32 %v68, %v304
  %v306 = vpop.f32.mrf.mxu0
  %v307 = vpop.f32.mrf.mxu0
  %v308 = vadd.f32 %v68, %v307
  %v309 = vpop.f32.mrf.mxu0
  %310 = vmatprep.mubr.bf16.mxu0 0
  %311 = vmatmul.mubr.bf16.gmra.mxu0 %v142
  %v312 = vpop.f32.mrf.mxu0
  %v313 = vadd.f32 %v68, %v312
  %v314 = vpop.f32.mrf.mxu0
  %v315 = vpop.f32.mrf.mxu0
  %v316 = vadd.f32 %v68, %v315
  %v317 = vpop.f32.mrf.mxu0
  %318 = vmatprep.mubr.bf16.mxu0 0
  %319 = vmatmul.mubr.bf16.gmra.mxu0 %v143
  %v320 = vpop.f32.mrf.mxu0
  %v321 = vadd.f32 %v68, %v320
  %v322 = vpop.f32.mrf.mxu0
  %v323 = vpop.f32.mrf.mxu0
  %v324 = vadd.f32 %v68, %v323
  %v325 = vpop.f32.mrf.mxu0
  %326 = vmatprep.mubr.bf16.mxu0 0
  %327 = vmatmul.mubr.bf16.gmra.mxu0 %v144
  %v328 = vpop.f32.mrf.mxu0
  %v329 = vadd.f32 %v68, %v328
  %v330 = vpop.f32.mrf.mxu0
  %v331 = vpop.f32.mrf.mxu0
  %v332 = vadd.f32 %v68, %v331
  %v333 = vpop.f32.mrf.mxu0
  %334 = vmatprep.mubr.bf16.mxu0 0
  %335 = vmatmul.mubr.bf16.gmra.mxu0 %v145
  %v336 = vpop.f32.mrf.mxu0
  %v337 = vadd.f32 %v68, %v336
  %v338 = vpop.f32.mrf.mxu0
  %v339 = vpop.f32.mrf.mxu0
  %v340 = vadd.f32 %v68, %v339
  %v341 = vpop.f32.mrf.mxu0
  %342 = vmatprep.mubr.bf16.mxu0 0
  %343 = vmatmul.mubr.bf16.gmra.mxu0 %v146
  %v344 = vpop.f32.mrf.mxu0
  %v345 = vadd.f32 %v68, %v344
  %v346 = vpop.f32.mrf.mxu0
  %v347 = vpop.f32.mrf.mxu0
  %v348 = vadd.f32 %v68, %v347
  %v349 = vpop.f32.mrf.mxu0
  %350 = vmatprep.mubr.bf16.mxu0 0
  %351 = vmatmul.mubr.bf16.gmra.mxu0 %v147
  %v352 = vpop.f32.mrf.mxu0
  %v353 = vadd.f32 %v68, %v352
  %v354 = vpop.f32.mrf.mxu0
  %v355 = vpop.f32.mrf.mxu0
  %v356 = vadd.f32 %v68, %v355
  %v357 = vpop.f32.mrf.mxu0
  %358 = vmatprep.mubr.bf16.mxu0 0
  %359 = vmatmul.mubr.bf16.gmra.mxu0 %v148
  %v360 = vpop.f32.mrf.mxu0
  %v361 = vadd.f32 %v68, %v360
  %v362 = vpop.f32.mrf.mxu0
  %v363 = vpop.f32.mrf.mxu0
  %v364 = vadd.f32 %v68, %v363
  %v365 = vpop.f32.mrf.mxu0
  %366 = vmatprep.mubr.bf16.mxu0 0
  %367 = vmatmul.mubr.bf16.gmra.mxu0 %v149
  %v368 = vpop.f32.mrf.mxu0
  %v369 = vadd.f32 %v68, %v368
  %v370 = vpop.f32.mrf.mxu0
  %v371 = vpop.f32.mrf.mxu0
  %v372 = vadd.f32 %v68, %v371
  %v373 = vpop.f32.mrf.mxu0
  %374 = vdwg.mxu0
  %375 = vst [vmem:[%s3] sm:$0xff] %v249
  %376 = vst [vmem:[%s3 + $0x8] sm:$0xff] %v252
  %377 = vst [vmem:[%s3 + $0x10] sm:$0xff] %v257
  %378 = vst [vmem:[%s3 + $0x18] sm:$0xff] %v260
  %379 = vst [vmem:[%s3 + $0x20] sm:$0xff] %v265
  %380 = vst [vmem:[%s3 + $0x28] sm:$0xff] %v268
  %381 = vst [vmem:[%s3 + $0x30] sm:$0xff] %v273
  %382 = vst [vmem:[%s3 + $0x38] sm:$0xff] %v276
  %383 = vst [vmem:[%s3 + $0x40] sm:$0xff] %v281
  %384 = vst [vmem:[%s3 + $0x48] sm:$0xff] %v284
  %385 = vst [vmem:[%s3 + $0x50] sm:$0xff] %v289
  %386 = vst [vmem:[%s3 + $0x58] sm:$0xff] %v292
  %387 = vst [vmem:[%s3 + $0x60] sm:$0xff] %v297
  %388 = vst [vmem:[%s3 + $0x68] sm:$0xff] %v300
  %389 = vst [vmem:[%s3 + $0x70] sm:$0xff] %v305
  %390 = vst [vmem:[%s3 + $0x78] sm:$0xff] %v308
  %391 = vst [vmem:[%s3 + $0x80] sm:$0xff] %v313
  %392 = vst [vmem:[%s3 + $0x88] sm:$0xff] %v316
  %393 = vst [vmem:[%s3 + $0x90] sm:$0xff] %v321
  %394 = vst [vmem:[%s3 + $0x98] sm:$0xff] %v324
  %395 = vst [vmem:[%s3 + $0xa0] sm:$0xff] %v329
  %396 = vst [vmem:[%s3 + $0xa8] sm:$0xff] %v332
  %397 = vst [vmem:[%s3 + $0xb0] sm:$0xff] %v337
  %398 = vst [vmem:[%s3 + $0xb8] sm:$0xff] %v340
  %399 = vst [vmem:[%s3 + $0xc0] sm:$0xff] %v345
  %400 = vst [vmem:[%s3 + $0xc8] sm:$0xff] %v348
  %401 = vst [vmem:[%s3 + $0xd0] sm:$0xff] %v353
  %402 = vst [vmem:[%s3 + $0xd8] sm:$0xff] %v356
  %403 = vst [vmem:[%s3 + $0xe0] sm:$0xff] %v361
  %404 = vst [vmem:[%s3 + $0xe8] sm:$0xff] %v364
  %405 = vst [vmem:[%s3 + $0xf0] sm:$0xff] %v369
  %406 = vst [vmem:[%s3 + $0xf8] sm:$0xff] %v372
  // Predicated region
  $region14: #{patch_embed_3d.1} parent=0 // pred_check
    _
  $region15: #{patch_embed_3d.1} parent=0 // pred_check_branch
    %408 = sbr.rel (0) target = $region17
  $region16: #{patch_embed_3d.1} parent=0 // pred_region
    _
  $region17: #{patch_embed_3d.1} parent=0 // pred_fallthru
    _
  // Predicated region
  $region18: #{patch_embed_3d.1} parent=0 // pred_check
    _
  $region19: #{patch_embed_3d.1} parent=0 // pred_check_branch
    %410 = sbr.rel (0) target = $region21
  $region20: #{patch_embed_3d.1} parent=0 // pred_region
    _
  $region21: #{patch_embed_3d.1} parent=0 // pred_fallthru
    _

</llo_original>
